<compile_context>
chip_gen: v5e
topology: v5e:2x2
jax: 0.10.0
libtpu: 0.0.40
codegen_flags: <defaults>
</compile_context>

<pallas_src>
import math
from functools import partial

import jax
import jax.numpy as jnp
from jax.experimental import pallas as pl
from jax.experimental.pallas import tpu as pltpu


def _round_up(x, m):
    return ((x + m - 1) // m) * m


def parser_mlp_kernel(x_ref, w1_ref, b1_ref, w2_ref, b2_ref, out_ref):
    # x_ref:  (TB, D_pad)   bf16 (or f32)
    # w1_ref: (D_pad, H_pad) bf16   b1_ref: (1, H_pad) f32
    # w2_ref: (H_pad, C_pad) bf16   b2_ref: (1, C_pad) f32
    # out_ref:(TB, C_pad)   f32  (lane-dense: C_pad is a multiple of 128)
    h = jnp.dot(x_ref[...], w1_ref[...], preferred_element_type=jnp.float32)
    h = jnp.maximum(h + b1_ref[...], 0.0)  # bias + ReLU in the f32 accumulator
    # TODO(synk): nn.Dropout is identity at inference; training-mode stochastic
    # dropout (pltpu.prng_*) is intentionally not applied here.
    out_ref[...] = (
        jnp.dot(h.astype(w2_ref.dtype), w2_ref[...], preferred_element_type=jnp.float32)
        + b2_ref[...]
    )


def prepare_parser_params(embeddings, w1, b1, w2, b2, *, compute_dtype=jnp.bfloat16):
    """One-time weight prep: pad to lane-friendly shapes and cast matmul operands.

    w1: (n_features*embed_size, hidden)  (transposed vs. PyTorch weight layout)
    w2: (hidden, n_classes)              (transposed vs. PyTorch weight layout)
    Biases stay in f32 (added to the f32 MXU accumulator inside the kernel).
    """
    D, H = w1.shape
    C = w2.shape[1]
    D_pad = _round_up(D, 128)
    H_pad = _round_up(max(H, 128), 128)
    C_pad = _round_up(max(C, 128), 128)

    w1_p = jnp.pad(w1.astype(compute_dtype), ((0, D_pad - D), (0, H_pad - H)))
    b1_p = jnp.pad(b1.reshape(1, H).astype(jnp.float32), ((0, 0), (0, H_pad - H)))
    w2_p = jnp.pad(w2.astype(compute_dtype), ((0, H_pad - H), (0, C_pad - C)))
    b2_p = jnp.pad(b2.reshape(1, C).astype(jnp.float32), ((0, 0), (0, C_pad - C)))

    return {
        "embeddings": embeddings.astype(jnp.float32),
        "w1": w1_p, "b1": b1_p, "w2": w2_p, "b2": b2_p,
        "dims": (D, H, C, D_pad, H_pad, C_pad),
        "compute_dtype": compute_dtype,
    }


def _pick_block_b(B):
    # Small batch: one tile (multiple of 16 sublanes for bf16 packing).
    # Large batch: 256-row tiles -> fills the MXU M dim on v6e/v7x, plenty for v5e,
    # and gives >=2 grid steps so the "parallel" axis lands on both v7x TCs.
    if B <= 256:
        return _round_up(max(B, 16), 16)
    return 256


def parser_model_forward(t, params):
    """Forward pass of ParserModel.

    t: (B, n_features) int32 token indices.
    params: output of prepare_parser_params().
    returns: (B, n_classes) float32 logits.
    """
    emb = params["embeddings"]
    w1_p, b1_p, w2_p, b2_p = params["w1"], params["b1"], params["w2"], params["b2"]
    D, H, C, D_pad, H_pad, C_pad = params["dims"]
    cdt = params["compute_dtype"]

    B = t.shape[0]

    # Glue: embedding lookup + flatten (== pretrained_embeddings(t).view(B, -1)).
    # TODO(synk): for large-batch serving, fuse this gather in-kernel (VMEM-resident
    # 12.8 KB table + scalar-prefetched indices) to avoid the x HBM round trip; for
    # small batches the plain-JAX gather is negligible.
    x = jnp.take(emb, t.reshape(-1), axis=0).reshape(B, D).astype(cdt)

    block_b = _pick_block_b(B)
    B_pad = _round_up(B, block_b)

    # Zero padding is numerically inert: padded hidden cols give relu(0+0)=0 and the
    # matching w2 rows are zero; padded logit cols / batch rows are sliced off.
    x_p = jnp.pad(x, ((0, B_pad - B), (0, D_pad - D)))

    grid = (B_pad // block_b,)
    elt = jnp.dtype(cdt).itemsize

    cost = pl.CostEstimate(
        flops=2 * B_pad * D_pad * H_pad + 2 * B_pad * H_pad * C_pad,
        transcendentals=0,
        bytes_accessed=(elt * (B_pad * D_pad + D_pad * H_pad + H_pad * C_pad)
                        + 4 * (H_pad + C_pad + B_pad * C_pad)),
    )

    out_p = pl.pallas_call(
        parser_mlp_kernel,
        out_shape=jax.ShapeDtypeStruct((B_pad, C_pad), jnp.float32),
        grid_spec=pltpu.PrefetchScalarGridSpec(
            num_scalar_prefetch=0,
            grid=grid,
            in_specs=[
                # x tile walks the batch; weights/biases stay resident in VMEM.
                pl.BlockSpec((block_b, D_pad), lambda i: (i, 0)),
                pl.BlockSpec((D_pad, H_pad), lambda i: (0, 0)),
                pl.BlockSpec((1, H_pad), lambda i: (0, 0)),
                pl.BlockSpec((H_pad, C_pad), lambda i: (0, 0)),
                pl.BlockSpec((1, C_pad), lambda i: (0, 0)),
            ],
            out_specs=pl.BlockSpec((block_b, C_pad), lambda i: (i, 0)),
        ),
        compiler_params=pltpu.CompilerParams(
            dimension_semantics=("parallel",),   # v7x: shard batch tiles across both TCs
            vmem_limit_bytes=32 * 1024 * 1024,
        ),
        cost_estimate=cost,
    )(x_p, w1_p, b1_p, w2_p, b2_p)

    return out_p[:B, :C]


def xavier_uniform(key, fan_in, fan_out, shape):
    bound = math.sqrt(6.0 / (fan_in + fan_out))
    return jax.random.uniform(key, shape, jnp.float32, -bound, bound)


if __name__ == "__main__":
    # Small shapes consistent with the module (PyTorch defaults for hidden/classes).
    vocab = 100
    embed_size = 32
    n_features = 36
    hidden_size = 200
    n_classes = 3
    batch = 16

    key = jax.random.PRNGKey(0)
    k_emb, k_w1, k_b1, k_w2, k_b2, k_t = jax.random.split(key, 6)

    # "Pretrained" embeddings (deterministic synthetic).
    embeddings = jax.random.normal(k_emb, (vocab, embed_size), jnp.float32)

    # embed_to_hidden: PyTorch weight is (hidden, D); stored transposed (D, hidden).
    D = n_features * embed_size
    w1 = xavier_uniform(k_w1, fan_in=D, fan_out=hidden_size, shape=(D, hidden_size))
    b1 = jax.random.uniform(k_b1, (hidden_size,), jnp.float32,
                            -1.0 / math.sqrt(D), 1.0 / math.sqrt(D))

    # hidden_to_logits: PyTorch weight is (n_classes, hidden); stored transposed.
    w2 = xavier_uniform(k_w2, fan_in=hidden_size, fan_out=n_classes,
                        shape=(hidden_size, n_classes))
    b2 = jax.random.uniform(k_b2, (n_classes,), jnp.float32,
                            -1.0 / math.sqrt(hidden_size), 1.0 / math.sqrt(hidden_size))

    # Input token indices.
    t = jax.random.randint(k_t, (batch, n_features), 0, vocab, jnp.int32)

    # One-time weight prep (hoisted out of the per-call hot path).
    params = prepare_parser_params(embeddings, w1, b1, w2, b2,
                                   compute_dtype=jnp.bfloat16)

    logits = parser_model_forward(t, params)
    jax.block_until_ready(logits)
    assert logits.shape == (batch, n_classes)

    # Reference 1: matched precision (bf16 operands, f32 accumulation) — tight check.
    x_f32 = jnp.take(embeddings, t.reshape(-1), axis=0).reshape(batch, -1)
    x_bf = x_f32.astype(jnp.bfloat16)
    h_mp = jnp.maximum(
        jnp.dot(x_bf, w1.astype(jnp.bfloat16), preferred_element_type=jnp.float32)
        + b1[None, :], 0.0)
    logits_mp = (jnp.dot(h_mp.astype(jnp.bfloat16), w2.astype(jnp.bfloat16),
                         preferred_element_type=jnp.float32) + b2[None, :])
    assert jnp.allclose(logits, logits_mp, atol=1e-2, rtol=1e-2)

    # Reference 2: pure f32 math (eval-mode dropout = identity) — loose check for
    # expected bf16 drift.
    h_ref = jnp.maximum(x_f32 @ w1 + b1[None, :], 0.0)
    logits_ref = h_ref @ w2 + b2[None, :]
    assert jnp.allclose(logits, logits_ref, atol=5e-2, rtol=5e-2)

    print("KERNEL_OK")
</pallas_src>

<mosaic_0001>
module attributes {stable_mosaic.version = 11 : i64} {
  func.func @parser_mlp_kernel(%arg0: i32, %arg1: memref<16x1152xbf16, #tpu.memory_space<vmem>>, %arg2: memref<1152x256xbf16, #tpu.memory_space<vmem>>, %arg3: memref<1x256xf32, #tpu.memory_space<vmem>>, %arg4: memref<256x128xbf16, #tpu.memory_space<vmem>>, %arg5: memref<1x128xf32, #tpu.memory_space<vmem>>, %arg6: memref<16x128xf32, #tpu.memory_space<vmem>>) attributes {dimension_semantics = [#tpu.dimension_semantics<parallel>], iteration_bounds = array<i64: 1>, scalar_prefetch = 0 : i64, scratch_operands = 0 : i64, tpu.core_type = #tpu.core_type<tc>, window_params = [{transform_indices = @transform_0, window_bounds = array<i64: 16, 1152>}, {pipeline_mode = #tpu.pipeline_mode<synchronous>, transform_indices = @transform_1, window_bounds = array<i64: 1152, 256>}, {pipeline_mode = #tpu.pipeline_mode<synchronous>, transform_indices = @transform_2, window_bounds = array<i64: 1, 256>}, {pipeline_mode = #tpu.pipeline_mode<synchronous>, transform_indices = @transform_3, window_bounds = array<i64: 256, 128>}, {pipeline_mode = #tpu.pipeline_mode<synchronous>, transform_indices = @transform_4, window_bounds = array<i64: 1, 128>}, {transform_indices = @transform_5, window_bounds = array<i64: 16, 128>}]} {
    %c0 = arith.constant 0 : index
    %c0_0 = arith.constant 0 : index
    %0 = vector.load %arg1[%c0, %c0_0] : memref<16x1152xbf16, #tpu.memory_space<vmem>>, vector<16x1152xbf16>
    %c0_1 = arith.constant 0 : index
    %c0_2 = arith.constant 0 : index
    %1 = vector.load %arg2[%c0_1, %c0_2] : memref<1152x256xbf16, #tpu.memory_space<vmem>>, vector<1152x256xbf16>
    %cst = arith.constant dense<0.000000e+00> : vector<16x256xf32>
    %2 = tpu.matmul %0, %1, %cst {dimension_numbers = #tpu.dot_dimension_numbers<[1], [0], [0], [1], [0, 0, 1, 1], [], []>} : vector<16x1152xbf16>, vector<1152x256xbf16>, vector<16x256xf32> -> vector<16x256xf32>
    %c0_3 = arith.constant 0 : index
    %c0_4 = arith.constant 0 : index
    %3 = vector.load %arg3[%c0_3, %c0_4] : memref<1x256xf32, #tpu.memory_space<vmem>>, vector<1x256xf32>
    %4 = vector.broadcast %3 : vector<1x256xf32> to vector<16x256xf32>
    %5 = arith.addf %2, %4 : vector<16x256xf32>
    %cst_5 = arith.constant 0.000000e+00 : f32
    %6 = vector.broadcast %cst_5 : f32 to vector<16x256xf32>
    %7 = arith.maximumf %5, %6 : vector<16x256xf32>
    %8 = arith.truncf %7 : vector<16x256xf32> to vector<16x256xbf16>
    %c0_6 = arith.constant 0 : index
    %c0_7 = arith.constant 0 : index
    %9 = vector.load %arg4[%c0_6, %c0_7] : memref<256x128xbf16, #tpu.memory_space<vmem>>, vector<256x128xbf16>
    %cst_8 = arith.constant dense<0.000000e+00> : vector<16x128xf32>
    %10 = tpu.matmul %8, %9, %cst_8 {dimension_numbers = #tpu.dot_dimension_numbers<[1], [0], [0], [1], [0, 0, 1, 1], [], []>} : vector<16x256xbf16>, vector<256x128xbf16>, vector<16x128xf32> -> vector<16x128xf32>
    %c0_9 = arith.constant 0 : index
    %c0_10 = arith.constant 0 : index
    %11 = vector.load %arg5[%c0_9, %c0_10] : memref<1x128xf32, #tpu.memory_space<vmem>>, vector<1x128xf32>
    %12 = vector.broadcast %11 : vector<1x128xf32> to vector<16x128xf32>
    %13 = arith.addf %10, %12 : vector<16x128xf32>
    %c0_11 = arith.constant 0 : index
    %c0_12 = arith.constant 0 : index
    %14 = vector.load %arg6[%c0_11, %c0_12] : memref<16x128xf32, #tpu.memory_space<vmem>>, vector<16x128xf32>
    tpu.vector_store %arg6[%c0_11, %c0_12], %13 {strides = array<i32>} : memref<16x128xf32, #tpu.memory_space<vmem>>, vector<16x128xf32>,
    return
  }
  func.func @transform_0(%arg0: i32) -> (i32, i32) {
    %c0_i32 = arith.constant 0 : i32
    %c0_i32_0 = arith.constant 0 : i32
    return %arg0, %c0_i32 : i32, i32
  }
  func.func @transform_1(%arg0: i32) -> (i32, i32) {
    %c0_i32 = arith.constant 0 : i32
    %c0_i32_0 = arith.constant 0 : i32
    %c0_i32_1 = arith.constant 0 : i32
    return %c0_i32, %c0_i32_0 : i32, i32
  }
  func.func @transform_2(%arg0: i32) -> (i32, i32) {
    %c0_i32 = arith.constant 0 : i32
    %c0_i32_0 = arith.constant 0 : i32
    %c0_i32_1 = arith.constant 0 : i32
    return %c0_i32, %c0_i32_0 : i32, i32
  }
  func.func @transform_3(%arg0: i32) -> (i32, i32) {
    %c0_i32 = arith.constant 0 : i32
    %c0_i32_0 = arith.constant 0 : i32
    %c0_i32_1 = arith.constant 0 : i32
    return %c0_i32, %c0_i32_0 : i32, i32
  }
  func.func @transform_4(%arg0: i32) -> (i32, i32) {
    %c0_i32 = arith.constant 0 : i32
    %c0_i32_0 = arith.constant 0 : i32
    %c0_i32_1 = arith.constant 0 : i32
    return %c0_i32, %c0_i32_0 : i32, i32
  }
  func.func @transform_5(%arg0: i32) -> (i32, i32) {
    %c0_i32 = arith.constant 0 : i32
    %c0_i32_0 = arith.constant 0 : i32
    return %arg0, %c0_i32 : i32, i32
  }
}

</mosaic_0001>

<llo_original>
// kernel: tpu_custom_call.1
$region0: #{tpu_custom_call.1}
  #allocation0 [shape = 'u32[]', space=smem, size = 0x4, offset = 0x4, fixed_abs, tag = 'smem constant byte address 0x4 - core index']
  #allocation1 [shape = 'u32[72,128]{1,0:T(1,128)}', space=vmem, size = 0x9000, scoped, tag = 'internal scratch']
  %s0 = inlined_call_operand.hbm [shape: bf16[16,1152], index: 0, kind: input, shape index: {}]
  %s1 = inlined_call_operand.hbm [shape: bf16[1152,256], index: 1, kind: input, shape index: {}]
  %s2 = inlined_call_operand.hbm [shape: f32[1,256], index: 2, kind: input, shape index: {}]
  %s3 = inlined_call_operand.hbm [shape: bf16[256,128], index: 3, kind: input, shape index: {}]
  %s4 = inlined_call_operand.vmem [shape: f32[1,128], index: 4, kind: input, shape index: {}]
  %s5 = inlined_call_operand.hbm [shape: f32[16,128], index: 5, kind: output, shape index: {}]
  %s6 = sld [smem:[#allocation0]]
  $region46: #{tpu_custom_call.1} parent=0
    _
  %s8 = ssub.s32 1, %s6
  %s9 = scalar_select 0, %s8, %s6
  $region1: #{tpu_custom_call.1} parent=0
    #allocation2 [shape = 'u8[36864]{0}', space=vmem, size = 0x9000, scoped, tag = 'input window, operand 0, single buffered']
    #allocation3 [shape = 's32[1]{0}', space=sflag, size = 0x4, scoped, tag = 'scoped memory for tpu_custom_call.1']
    #allocation4 [shape = 's32[1]{0}', space=sflag, size = 0x4, scoped, tag = 'scoped memory for tpu_custom_call.1']
    #allocation5 [shape = 'u8[589824]{0}', space=vmem, size = 0x90000, scoped, tag = 'input window, operand 1, single buffered']
    #allocation6 [shape = 's32[1]{0}', space=sflag, size = 0x4, scoped, tag = 'scoped memory for tpu_custom_call.1']
    #allocation7 [shape = 'u8[1024]{0}', space=vmem, size = 0x400, scoped, tag = 'input window, operand 2, single buffered']
    #allocation8 [shape = 'u8[65536]{0}', space=vmem, size = 0x10000, scoped, tag = 'input window, operand 3, single buffered']
    #allocation9 [shape = 's32[1]{0}', space=sflag, size = 0x4, scoped, tag = 'scoped memory for tpu_custom_call.1']
    #allocation10 [shape = 'u8[8192]{0}', space=vmem, size = 0x2000, scoped, tag = 'output window, operand 0, single buffered']
    %10 = vsyncpa [#allocation3], 0
    %11 = vsyncpa [#allocation6], 0
    %12 = vsyncpa [#allocation9], 0
    %13 = vsyncpa [#allocation4], 0
    // Predicated region
    $region2: #{tpu_custom_call.1} parent=1 // pred_check
      _
    $region3: #{tpu_custom_call.1} parent=1 // pred_check_branch
      %15 = sbr.rel (0) target = $region5
    $region4: #{tpu_custom_call.1} parent=1 // pred_region
      %17 = vsyncadd [#allocation3], 0
      %s18 = sshll.u32 %s0, 4
      %s19 = int_to_ptr.hbm [resolvable:$true] %s18
      %s20 = sshll.u32 [#allocation2], 4
      %s21 = int_to_ptr.vmem [resolvable:$true] %s20
      %26 = dma.hbm_to_vmem [thread:$0]  %s19, 1152, %s21, [#allocation3], 576, 576, 36
    $region5: #{tpu_custom_call.1} parent=1 // pred_fallthru
      _
    // Predicated region
    $region6: #{tpu_custom_call.1} parent=1 // pred_check
      _
    $region7: #{tpu_custom_call.1} parent=1 // pred_check_branch
      %28 = sbr.rel (0) target = $region9
    $region8: #{tpu_custom_call.1} parent=1 // pred_region
      %30 = vsyncadd [#allocation6], 0
      %s31 = sshll.u32 %s1, 4
      %s32 = int_to_ptr.hbm [resolvable:$true] %s31
      %s33 = sshll.u32 [#allocation5], 4
      %s34 = int_to_ptr.vmem [resolvable:$true] %s33
      %39 = dma.hbm_to_vmem [thread:$0]  %s32, 18432, %s34, [#allocation6], 128, 128, 8
    $region9: #{tpu_custom_call.1} parent=1 // pred_fallthru
      _
    // Predicated region
    $region10: #{tpu_custom_call.1} parent=1 // pred_check
      _
    $region11: #{tpu_custom_call.1} parent=1 // pred_check_branch
      %41 = sbr.rel (0) target = $region13
    $region12: #{tpu_custom_call.1} parent=1 // pred_region
      %43 = vsyncadd [#allocation6], 0
      %s45 = sshll.u32 %s2, 4
      %s46 = int_to_ptr.hbm [resolvable:$true] %s45
      %s47 = sshll.u32 [#allocation7], 4
      %s48 = int_to_ptr.vmem [resolvable:$true] %s47
      %50 = dma.hbm_to_vmem [thread:$0]  %s46, 32, %s48, [#allocation6]
    $region13: #{tpu_custom_call.1} parent=1 // pred_fallthru
      _
    // Predicated region
    $region14: #{tpu_custom_call.1} parent=1 // pred_check
      _
    $region15: #{tpu_custom_call.1} parent=1 // pred_check_branch
      %52 = sbr.rel (0) target = $region17
    $region16: #{tpu_custom_call.1} parent=1 // pred_region
      %54 = vsyncadd [#allocation9], 0
      %s55 = sshll.u32 %s3, 4
      %s56 = int_to_ptr.hbm [resolvable:$true] %s55
      %s57 = sshll.u32 [#allocation8], 4
      %s58 = int_to_ptr.vmem [resolvable:$true] %s57
      %63 = dma.hbm_to_vmem [thread:$0]  %s56, 2048, %s58, [#allocation9], 64, 64, 4
    $region17: #{tpu_custom_call.1} parent=1 // pred_fallthru
      _
    // Predicated region
    $region18: #{tpu_custom_call.1} parent=1 // pred_check
      _
    $region19: #{tpu_custom_call.1} parent=1 // pred_check_branch
      %65 = sbr.rel (0) target = $region21
    $region20: #{tpu_custom_call.1} parent=1 // pred_region
      _
    $region21: #{tpu_custom_call.1} parent=1 // pred_fallthru
      _
    // Predicated region
    $region22: #{tpu_custom_call.1} parent=1 // pred_check
      _
    $region23: #{tpu_custom_call.1} parent=1 // pred_check_branch
      %67 = sbr.rel (0) target = $region25
    $region24: #{tpu_custom_call.1} parent=1 // pred_region
      %69 = dma.done [#allocation3], 1152
    $region25: #{tpu_custom_call.1} parent=1 // pred_fallthru
      _
    // Predicated region
    $region26: #{tpu_custom_call.1} parent=1 // pred_check
      _
    $region27: #{tpu_custom_call.1} parent=1 // pred_check_branch
      %71 = sbr.rel (0) target = $region29
    $region28: #{tpu_custom_call.1} parent=1 // pred_region
      %73 = dma.done [#allocation6], 18432
    $region29: #{tpu_custom_call.1} parent=1 // pred_fallthru
      _
    // Predicated region
    $region30: #{tpu_custom_call.1} parent=1 // pred_check
      _
    $region31: #{tpu_custom_call.1} parent=1 // pred_check_branch
      %75 = sbr.rel (0) target = $region33
    $region32: #{tpu_custom_call.1} parent=1 // pred_region
      %77 = dma.done [#allocation6], 32
    $region33: #{tpu_custom_call.1} parent=1 // pred_fallthru
      _
    // Predicated region
    $region34: #{tpu_custom_call.1} parent=1 // pred_check
      _
    $region35: #{tpu_custom_call.1} parent=1 // pred_check_branch
      %79 = sbr.rel (0) target = $region37
    $region36: #{tpu_custom_call.1} parent=1 // pred_region
      %81 = dma.done [#allocation9], 2048
    $region37: #{tpu_custom_call.1} parent=1 // pred_fallthru
      _
    %v82 = vld [vmem:[#allocation2] sm:$0xff]
    %v83 = vld [vmem:[#allocation2 + $0x8] sm:$0xff]
    %v84 = vld [vmem:[#allocation2 + $0x10] sm:$0xff]
    %v85 = vld [vmem:[#allocation2 + $0x18] sm:$0xff]
    %v86 = vld [vmem:[#allocation2 + $0x20] sm:$0xf]
    %v87 = vld [vmem:[#allocation2 + $0x24] sm:$0xff]
    %v88 = vld [vmem:[#allocation2 + $0x2c] sm:$0xff]
    %v89 = vld [vmem:[#allocation2 + $0x34] sm:$0xff]
    %v90 = vld [vmem:[#allocation2 + $0x3c] sm:$0xff]
    %v91 = vld [vmem:[#allocation2 + $0x44] sm:$0xf]
    %v92 = vld [vmem:[#allocation5] sm:$0xff]
    %v93 = vld [vmem:[#allocation5 + $0x8] sm:$0xff]
    %v94 = vld [vmem:[#allocation5 + $0x10] sm:$0xff]
    %v95 = vld [vmem:[#allocation5 + $0x18] sm:$0xff]
    %v96 = vld [vmem:[#allocation5 + $0x20] sm:$0xff]
    %v97 = vld [vmem:[#allocation5 + $0x28] sm:$0xff]
    %v98 = vld [vmem:[#allocation5 + $0x30] sm:$0xff]
    %v99 = vld [vmem:[#allocation5 + $0x38] sm:$0xff]
    %v100 = vld [vmem:[#allocation5 + $0x40] sm:$0xff]
    %v101 = vld [vmem:[#allocation5 + $0x48] sm:$0xff]
    %v102 = vld [vmem:[#allocation5 + $0x50] sm:$0xff]
    %v103 = vld [vmem:[#allocation5 + $0x58] sm:$0xff]
    %v104 = vld [vmem:[#allocation5 + $0x60] sm:$0xff]
    %v105 = vld [vmem:[#allocation5 + $0x68] sm:$0xff]
    %v106 = vld [vmem:[#allocation5 + $0x70] sm:$0xff]
    %v107 = vld [vmem:[#allocation5 + $0x78] sm:$0xff]
    %v108 = vld [vmem:[#allocation5 + $0x80] sm:$0xff]
    %v109 = vld [vmem:[#allocation5 + $0x88] sm:$0xff]
    %v110 = vld [vmem:[#allocation5 + $0x90] sm:$0xff]
    %v111 = vld [vmem:[#allocation5 + $0x98] sm:$0xff]
    %v112 = vld [vmem:[#allocation5 + $0xa0] sm:$0xff]
    %v113 = vld [vmem:[#allocation5 + $0xa8] sm:$0xff]
    %v114 = vld [vmem:[#allocation5 + $0xb0] sm:$0xff]
    %v115 = vld [vmem:[#allocation5 + $0xb8] sm:$0xff]
    %v116 = vld [vmem:[#allocation5 + $0xc0] sm:$0xff]
    %v117 = vld [vmem:[#allocation5 + $0xc8] sm:$0xff]
    %v118 = vld [vmem:[#allocation5 + $0xd0] sm:$0xff]
    %v119 = vld [vmem:[#allocation5 + $0xd8] sm:$0xff]
    %v120 = vld [vmem:[#allocation5 + $0xe0] sm:$0xff]
    %v121 = vld [vmem:[#allocation5 + $0xe8] sm:$0xff]
    %v122 = vld [vmem:[#allocation5 + $0xf0] sm:$0xff]
    %v123 = vld [vmem:[#allocation5 + $0xf8] sm:$0xff]
    %v124 = vld [vmem:[#allocation5 + $0x100] sm:$0xff]
    %v125 = vld [vmem:[#allocation5 + $0x108] sm:$0xff]
    %v126 = vld [vmem:[#allocation5 + $0x110] sm:$0xff]
    %v127 = vld [vmem:[#allocation5 + $0x118] sm:$0xff]
    %v128 = vld [vmem:[#allocation5 + $0x120] sm:$0xff]
    %v129 = vld [vmem:[#allocation5 + $0x128] sm:$0xff]
    %v130 = vld [vmem:[#allocation5 + $0x130] sm:$0xff]
    %v131 = vld [vmem:[#allocation5 + $0x138] sm:$0xff]
    %v132 = vld [vmem:[#allocation5 + $0x140] sm:$0xff]
    %v133 = vld [vmem:[#allocation5 + $0x148] sm:$0xff]
    %v134 = vld [vmem:[#allocation5 + $0x150] sm:$0xff]
    %v135 = vld [vmem:[#allocation5 + $0x158] sm:$0xff]
    %v136 = vld [vmem:[#allocation5 + $0x160] sm:$0xff]
    %v137 = vld [vmem:[#allocation5 + $0x168] sm:$0xff]
    %v138 = vld [vmem:[#allocation5 + $0x170] sm:$0xff]
    %v139 = vld [vmem:[#allocation5 + $0x178] sm:$0xff]
    %v140 = vld [vmem:[#allocation5 + $0x180] sm:$0xff]
    %v141 = vld [vmem:[#allocation5 + $0x188] sm:$0xff]
    %v142 = vld [vmem:[#allocation5 + $0x190] sm:$0xff]
    %v143 = vld [vmem:[#allocation5 + $0x198] sm:$0xff]
    %v144 = vld [vmem:[#allocation5 + $0x1a0] sm:$0xff]
    %v145 = vld [vmem:[#allocation5 + $0x1a8] sm:$0xff]
    %v146 = vld [vmem:[#allocation5 + $0x1b0] sm:$0xff]
    %v147 = vld [vmem:[#allocation5 + $0x1b8] sm:$0xff]
    %v148 = vld [vmem:[#allocation5 + $0x1c0] sm:$0xff]
    %v149 = vld [vmem:[#allocation5 + $0x1c8] sm:$0xff]
    %v150 = vld [vmem:[#allocation5 + $0x1d0] sm:$0xff]
    %v151 = vld [vmem:[#allocation5 + $0x1d8] sm:$0xff]
    %v152 = vld [vmem:[#allocation5 + $0x1e0] sm:$0xff]
    %v153 = vld [vmem:[#allocation5 + $0x1e8] sm:$0xff]
    %v154 = vld [vmem:[#allocation5 + $0x1f0] sm:$0xff]
    %v155 = vld [vmem:[#allocation5 + $0x1f8] sm:$0xff]
    %v156 = vld [vmem:[#allocation5 + $0x200] sm:$0xff]
    %v157 = vld [vmem:[#allocation5 + $0x208] sm:$0xff]
    %v158 = vld [vmem:[#allocation5 + $0x210] sm:$0xff]
    %v159 = vld [vmem:[#allocation5 + $0x218] sm:$0xff]
    %v160 = vld [vmem:[#allocation5 + $0x220] sm:$0xff]
    %v161 = vld [vmem:[#allocation5 + $0x228] sm:$0xff]
    %v162 = vld [vmem:[#allocation5 + $0x230] sm:$0xff]
    %v163 = vld [vmem:[#allocation5 + $0x238] sm:$0xff]
    %v164 = vld [vmem:[#allocation5 + $0x240] sm:$0xff]
    %v165 = vld [vmem:[#allocation5 + $0x248] sm:$0xff]
    %v166 = vld [vmem:[#allocation5 + $0x250] sm:$0xff]
    %v167 = vld [vmem:[#allocation5 + $0x258] sm:$0xff]
    %v168 = vld [vmem:[#allocation5 + $0x260] sm:$0xff]
    %v169 = vld [vmem:[#allocation5 + $0x268] sm:$0xff]
    %v170 = vld [vmem:[#allocation5 + $0x270] sm:$0xff]
    %v171 = vld [vmem:[#allocation5 + $0x278] sm:$0xff]
    %v172 = vld [vmem:[#allocation5 + $0x280] sm:$0xff]
    %v173 = vld [vmem:[#allocation5 + $0x288] sm:$0xff]
    %v174 = vld [vmem:[#allocation5 + $0x290] sm:$0xff]
    %v175 = vld [vmem:[#allocation5 + $0x298] sm:$0xff]
    %v176 = vld [vmem:[#allocation5 + $0x2a0] sm:$0xff]
    %v177 = vld [vmem:[#allocation5 + $0x2a8] sm:$0xff]
    %v178 = vld [vmem:[#allocation5 + $0x2b0] sm:$0xff]
    %v179 = vld [vmem:[#allocation5 + $0x2b8] sm:$0xff]
    %v180 = vld [vmem:[#allocation5 + $0x2c0] sm:$0xff]
    %v181 = vld [vmem:[#allocation5 + $0x2c8] sm:$0xff]
    %v182 = vld [vmem:[#allocation5 + $0x2d0] sm:$0xff]
    %v183 = vld [vmem:[#allocation5 + $0x2d8] sm:$0xff]
    %v184 = vld [vmem:[#allocation5 + $0x2e0] sm:$0xff]
    %v185 = vld [vmem:[#allocation5 + $0x2e8] sm:$0xff]
    %v186 = vld [vmem:[#allocation5 + $0x2f0] sm:$0xff]
    %v187 = vld [vmem:[#allocation5 + $0x2f8] sm:$0xff]
    %v188 = vld [vmem:[#allocation5 + $0x300] sm:$0xff]
    %v189 = vld [vmem:[#allocation5 + $0x308] sm:$0xff]
    %v190 = vld [vmem:[#allocation5 + $0x310] sm:$0xff]
    %v191 = vld [vmem:[#allocation5 + $0x318] sm:$0xff]
    %v192 = vld [vmem:[#allocation5 + $0x320] sm:$0xff]
    %v193 = vld [vmem:[#allocation5 + $0x328] sm:$0xff]
    %v194 = vld [vmem:[#allocation5 + $0x330] sm:$0xff]
    %v195 = vld [vmem:[#allocation5 + $0x338] sm:$0xff]
    %v196 = vld [vmem:[#allocation5 + $0x340] sm:$0xff]
    %v197 = vld [vmem:[#allocation5 + $0x348] sm:$0xff]
    %v198 = vld [vmem:[#allocation5 + $0x350] sm:$0xff]
    %v199 = vld [vmem:[#allocation5 + $0x358] sm:$0xff]
    %v200 = vld [vmem:[#allocation5 + $0x360] sm:$0xff]
    %v201 = vld [vmem:[#allocation5 + $0x368] sm:$0xff]
    %v202 = vld [vmem:[#allocation5 + $0x370] sm:$0xff]
    %v203 = vld [vmem:[#allocation5 + $0x378] sm:$0xff]
    %v204 = vld [vmem:[#allocation5 + $0x380] sm:$0xff]
    %v205 = vld [vmem:[#allocation5 + $0x388] sm:$0xff]
    %v206 = vld [vmem:[#allocation5 + $0x390] sm:$0xff]
    %v207 = vld [vmem:[#allocation5 + $0x398] sm:$0xff]
    %v208 = vld [vmem:[#allocation5 + $0x3a0] sm:$0xff]
    %v209 = vld [vmem:[#allocation5 + $0x3a8] sm:$0xff]
    %v210 = vld [vmem:[#allocation5 + $0x3b0] sm:$0xff]
    %v211 = vld [vmem:[#allocation5 + $0x3b8] sm:$0xff]
    %v212 = vld [vmem:[#allocation5 + $0x3c0] sm:$0xff]
    %v213 = vld [vmem:[#allocation5 + $0x3c8] sm:$0xff]
    %v214 = vld [vmem:[#allocation5 + $0x3d0] sm:$0xff]
    %v215 = vld [vmem:[#allocation5 + $0x3d8] sm:$0xff]
    %v216 = vld [vmem:[#allocation5 + $0x3e0] sm:$0xff]
    %v217 = vld [vmem:[#allocation5 + $0x3e8] sm:$0xff]
    %v218 = vld [vmem:[#allocation5 + $0x3f0] sm:$0xff]
    %v219 = vld [vmem:[#allocation5 + $0x3f8] sm:$0xff]
    %v220 = vld [vmem:[#allocation5 + $0x400] sm:$0xff]
    %v221 = vld [vmem:[#allocation5 + $0x408] sm:$0xff]
    %v222 = vld [vmem:[#allocation5 + $0x410] sm:$0xff]
    %v223 = vld [vmem:[#allocation5 + $0x418] sm:$0xff]
    %v224 = vld [vmem:[#allocation5 + $0x420] sm:$0xff]
    %v225 = vld [vmem:[#allocation5 + $0x428] sm:$0xff]
    %v226 = vld [vmem:[#allocation5 + $0x430] sm:$0xff]
    %v227 = vld [vmem:[#allocation5 + $0x438] sm:$0xff]
    %v228 = vld [vmem:[#allocation5 + $0x440] sm:$0xff]
    %v229 = vld [vmem:[#allocation5 + $0x448] sm:$0xff]
    %v230 = vld [vmem:[#allocation5 + $0x450] sm:$0xff]
    %v231 = vld [vmem:[#allocation5 + $0x458] sm:$0xff]
    %v232 = vld [vmem:[#allocation5 + $0x460] sm:$0xff]
    %v233 = vld [vmem:[#allocation5 + $0x468] sm:$0xff]
    %v234 = vld [vmem:[#allocation5 + $0x470] sm:$0xff]
    %v235 = vld [vmem:[#allocation5 + $0x478] sm:$0xff]
    %v236 = vld [vmem:[#allocation7] sm:$0x3]
    %v238 = vperm.slane %v236, 0
    %v239 = vperm.slane %v236, 1
    %v252 = vunpack.c.l.b16 %v82
    %v253 = vunpack.c.h.b16 %v82
    %v254 = vunpack.c.l.b16 %v83
    %v255 = vunpack.c.h.b16 %v83
    %v256 = vunpack.c.l.b16 %v84
    %v257 = vunpack.c.h.b16 %v84
    %v258 = vunpack.c.l.b16 %v85
    %v259 = vunpack.c.h.b16 %v85
    %v260 = vunpack.c.l.b16 %v86
    %v261 = vunpack.c.l.b16 %v87
    %v262 = vunpack.c.h.b16 %v87
    %v263 = vunpack.c.l.b16 %v88
    %v264 = vunpack.c.h.b16 %v88
    %v265 = vunpack.c.l.b16 %v89
    %v266 = vunpack.c.h.b16 %v89
    %v267 = vunpack.c.l.b16 %v90
    %v268 = vunpack.c.h.b16 %v90
    %v269 = vunpack.c.l.b16 %v91
    %v270 = vpack.c.b16 %v261, %v252
    %v271 = vpack.c.b16 %v262, %v253
    %v272 = vpack.c.b16 %v263, %v254
    %v273 = vpack.c.b16 %v264, %v255
    %v274 = vpack.c.b16 %v265, %v256
    %v275 = vpack.c.b16 %v266, %v257
    %v276 = vpack.c.b16 %v267, %v258
    %v277 = vpack.c.b16 %v268, %v259
    %v278 = vpack.c.b16 %v269, %v260
    %v432 = vunpack.c.l.b16 %v92
    %v433 = vunpack.c.h.b16 %v92
    %v434 = vunpack.c.l.b16 %v93
    %v435 = vunpack.c.h.b16 %v93
    %v436 = vunpack.c.l.b16 %v94
    %v437 = vunpack.c.h.b16 %v94
    %v438 = vunpack.c.l.b16 %v95
    %v439 = vunpack.c.h.b16 %v95
    %v440 = vunpack.c.l.b16 %v96
    %v441 = vunpack.c.h.b16 %v96
    %v442 = vunpack.c.l.b16 %v97
    %v443 = vunpack.c.h.b16 %v97
    %v444 = vunpack.c.l.b16 %v98
    %v445 = vunpack.c.h.b16 %v98
    %v446 = vunpack.c.l.b16 %v99
    %v447 = vunpack.c.h.b16 %v99
    %v448 = vunpack.c.l.b16 %v100
    %v449 = vunpack.c.h.b16 %v100
    %v450 = vunpack.c.l.b16 %v101
    %v451 = vunpack.c.h.b16 %v101
    %v452 = vunpack.c.l.b16 %v102
    %v453 = vunpack.c.h.b16 %v102
    %v454 = vunpack.c.l.b16 %v103
    %v455 = vunpack.c.h.b16 %v103
    %v456 = vunpack.c.l.b16 %v104
    %v457 = vunpack.c.h.b16 %v104
    %v458 = vunpack.c.l.b16 %v105
    %v459 = vunpack.c.h.b16 %v105
    %v460 = vunpack.c.l.b16 %v106
    %v461 = vunpack.c.h.b16 %v106
    %v462 = vunpack.c.l.b16 %v107
    %v463 = vunpack.c.h.b16 %v107
    %v464 = vunpack.c.l.b16 %v108
    %v465 = vunpack.c.h.b16 %v108
    %v466 = vunpack.c.l.b16 %v109
    %v467 = vunpack.c.h.b16 %v109
    %v468 = vunpack.c.l.b16 %v110
    %v469 = vunpack.c.h.b16 %v110
    %v470 = vunpack.c.l.b16 %v111
    %v471 = vunpack.c.h.b16 %v111
    %v472 = vunpack.c.l.b16 %v112
    %v473 = vunpack.c.h.b16 %v112
    %v474 = vunpack.c.l.b16 %v113
    %v475 = vunpack.c.h.b16 %v113
    %v476 = vunpack.c.l.b16 %v114
    %v477 = vunpack.c.h.b16 %v114
    %v478 = vunpack.c.l.b16 %v115
    %v479 = vunpack.c.h.b16 %v115
    %v480 = vunpack.c.l.b16 %v116
    %v481 = vunpack.c.h.b16 %v116
    %v482 = vunpack.c.l.b16 %v117
    %v483 = vunpack.c.h.b16 %v117
    %v484 = vunpack.c.l.b16 %v118
    %v485 = vunpack.c.h.b16 %v118
    %v486 = vunpack.c.l.b16 %v119
    %v487 = vunpack.c.h.b16 %v119
    %v488 = vunpack.c.l.b16 %v120
    %v489 = vunpack.c.h.b16 %v120
    %v490 = vunpack.c.l.b16 %v121
    %v491 = vunpack.c.h.b16 %v121
    %v492 = vunpack.c.l.b16 %v122
    %v493 = vunpack.c.h.b16 %v122
    %v494 = vunpack.c.l.b16 %v123
    %v495 = vunpack.c.h.b16 %v123
    %v496 = vunpack.c.l.b16 %v124
    %v497 = vunpack.c.h.b16 %v124
    %v498 = vunpack.c.l.b16 %v125
    %v499 = vunpack.c.h.b16 %v125
    %v500 = vunpack.c.l.b16 %v126
    %v501 = vunpack.c.h.b16 %v126
    %v502 = vunpack.c.l.b16 %v127
    %v503 = vunpack.c.h.b16 %v127
    %v504 = vunpack.c.l.b16 %v128
    %v505 = vunpack.c.h.b16 %v128
    %v506 = vunpack.c.l.b16 %v129
    %v507 = vunpack.c.h.b16 %v129
    %v508 = vunpack.c.l.b16 %v130
    %v509 = vunpack.c.h.b16 %v130
    %v510 = vunpack.c.l.b16 %v131
    %v511 = vunpack.c.h.b16 %v131
    %v512 = vunpack.c.l.b16 %v132
    %v513 = vunpack.c.h.b16 %v132
    %v514 = vunpack.c.l.b16 %v133
    %v515 = vunpack.c.h.b16 %v133
    %v516 = vunpack.c.l.b16 %v134
    %v517 = vunpack.c.h.b16 %v134
    %v518 = vunpack.c.l.b16 %v135
    %v519 = vunpack.c.h.b16 %v135
    %v520 = vunpack.c.l.b16 %v136
    %v521 = vunpack.c.h.b16 %v136
    %v522 = vunpack.c.l.b16 %v137
    %v523 = vunpack.c.h.b16 %v137
    %v524 = vunpack.c.l.b16 %v138
    %v525 = vunpack.c.h.b16 %v138
    %v526 = vunpack.c.l.b16 %v139
    %v527 = vunpack.c.h.b16 %v139
    %v528 = vunpack.c.l.b16 %v140
    %v529 = vunpack.c.h.b16 %v140
    %v530 = vunpack.c.l.b16 %v141
    %v531 = vunpack.c.h.b16 %v141
    %v532 = vunpack.c.l.b16 %v142
    %v533 = vunpack.c.h.b16 %v142
    %v534 = vunpack.c.l.b16 %v143
    %v535 = vunpack.c.h.b16 %v143
    %v536 = vunpack.c.l.b16 %v144
    %v537 = vunpack.c.h.b16 %v144
    %v538 = vunpack.c.l.b16 %v145
    %v539 = vunpack.c.h.b16 %v145
    %v540 = vunpack.c.l.b16 %v146
    %v541 = vunpack.c.h.b16 %v146
    %v542 = vunpack.c.l.b16 %v147
    %v543 = vunpack.c.h.b16 %v147
    %v544 = vunpack.c.l.b16 %v148
    %v545 = vunpack.c.h.b16 %v148
    %v546 = vunpack.c.l.b16 %v149
    %v547 = vunpack.c.h.b16 %v149
    %v548 = vunpack.c.l.b16 %v150
    %v549 = vunpack.c.h.b16 %v150
    %v550 = vunpack.c.l.b16 %v151
    %v551 = vunpack.c.h.b16 %v151
    %v552 = vunpack.c.l.b16 %v152
    %v553 = vunpack.c.h.b16 %v152
    %v554 = vunpack.c.l.b16 %v153
    %v555 = vunpack.c.h.b16 %v153
    %v556 = vunpack.c.l.b16 %v154
    %v557 = vunpack.c.h.b16 %v154
    %v558 = vunpack.c.l.b16 %v155
    %v559 = vunpack.c.h.b16 %v155
    %v560 = vunpack.c.l.b16 %v156
    %v561 = vunpack.c.h.b16 %v156
    %v562 = vunpack.c.l.b16 %v157
    %v563 = vunpack.c.h.b16 %v157
    %v564 = vunpack.c.l.b16 %v158
    %v565 = vunpack.c.h.b16 %v158
    %v566 = vunpack.c.l.b16 %v159
    %v567 = vunpack.c.h.b16 %v159
    %v568 = vunpack.c.l.b16 %v160
    %v569 = vunpack.c.h.b16 %v160
    %v570 = vunpack.c.l.b16 %v161
    %v571 = vunpack.c.h.b16 %v161
    %v572 = vunpack.c.l.b16 %v162
    %v573 = vunpack.c.h.b16 %v162
    %v574 = vunpack.c.l.b16 %v163
    %v575 = vunpack.c.h.b16 %v163
    %v576 = vunpack.c.l.b16 %v164
    %v577 = vunpack.c.h.b16 %v164
    %v578 = vunpack.c.l.b16 %v165
    %v579 = vunpack.c.h.b16 %v165
    %v580 = vunpack.c.l.b16 %v166
    %v581 = vunpack.c.h.b16 %v166
    %v582 = vunpack.c.l.b16 %v167
    %v583 = vunpack.c.h.b16 %v167
    %v584 = vunpack.c.l.b16 %v168
    %v585 = vunpack.c.h.b16 %v168
    %v586 = vunpack.c.l.b16 %v169
    %v587 = vunpack.c.h.b16 %v169
    %v588 = vunpack.c.l.b16 %v170
    %v589 = vunpack.c.h.b16 %v170
    %v590 = vunpack.c.l.b16 %v171
    %v591 = vunpack.c.h.b16 %v171
    %v592 = vunpack.c.l.b16 %v172
    %v593 = vunpack.c.h.b16 %v172
    %v594 = vunpack.c.l.b16 %v173
    %v595 = vunpack.c.h.b16 %v173
    %v596 = vunpack.c.l.b16 %v174
    %v597 = vunpack.c.h.b16 %v174
    %v598 = vunpack.c.l.b16 %v175
    %v599 = vunpack.c.h.b16 %v175
    %v600 = vunpack.c.l.b16 %v176
    %v601 = vunpack.c.h.b16 %v176
    %v602 = vunpack.c.l.b16 %v177
    %v603 = vunpack.c.h.b16 %v177
    %v604 = vunpack.c.l.b16 %v178
    %v605 = vunpack.c.h.b16 %v178
    %v606 = vunpack.c.l.b16 %v179
    %v607 = vunpack.c.h.b16 %v179
    %v608 = vunpack.c.l.b16 %v180
    %v609 = vunpack.c.h.b16 %v180
    %v610 = vunpack.c.l.b16 %v181
    %v611 = vunpack.c.h.b16 %v181
    %v612 = vunpack.c.l.b16 %v182
    %v613 = vunpack.c.h.b16 %v182
    %v614 = vunpack.c.l.b16 %v183
    %v615 = vunpack.c.h.b16 %v183
    %v616 = vunpack.c.l.b16 %v184
    %v617 = vunpack.c.h.b16 %v184
    %v618 = vunpack.c.l.b16 %v185
    %v619 = vunpack.c.h.b16 %v185
    %v620 = vunpack.c.l.b16 %v186
    %v621 = vunpack.c.h.b16 %v186
    %v622 = vunpack.c.l.b16 %v187
    %v623 = vunpack.c.h.b16 %v187
    %v624 = vunpack.c.l.b16 %v188
    %v625 = vunpack.c.h.b16 %v188
    %v626 = vunpack.c.l.b16 %v189
    %v627 = vunpack.c.h.b16 %v189
    %v628 = vunpack.c.l.b16 %v190
    %v629 = vunpack.c.h.b16 %v190
    %v630 = vunpack.c.l.b16 %v191
    %v631 = vunpack.c.h.b16 %v191
    %v632 = vunpack.c.l.b16 %v192
    %v633 = vunpack.c.h.b16 %v192
    %v634 = vunpack.c.l.b16 %v193
    %v635 = vunpack.c.h.b16 %v193
    %v636 = vunpack.c.l.b16 %v194
    %v637 = vunpack.c.h.b16 %v194
    %v638 = vunpack.c.l.b16 %v195
    %v639 = vunpack.c.h.b16 %v195
    %v640 = vunpack.c.l.b16 %v196
    %v641 = vunpack.c.h.b16 %v196
    %v642 = vunpack.c.l.b16 %v197
    %v643 = vunpack.c.h.b16 %v197
    %v644 = vunpack.c.l.b16 %v198
    %v645 = vunpack.c.h.b16 %v198
    %v646 = vunpack.c.l.b16 %v199
    %v647 = vunpack.c.h.b16 %v199
    %v648 = vunpack.c.l.b16 %v200
    %v649 = vunpack.c.h.b16 %v200
    %v650 = vunpack.c.l.b16 %v201
    %v651 = vunpack.c.h.b16 %v201
    %v652 = vunpack.c.l.b16 %v202
    %v653 = vunpack.c.h.b16 %v202
    %v654 = vunpack.c.l.b16 %v203
    %v655 = vunpack.c.h.b16 %v203
    %v656 = vunpack.c.l.b16 %v204
    %v657 = vunpack.c.h.b16 %v204
    %v658 = vunpack.c.l.b16 %v205
    %v659 = vunpack.c.h.b16 %v205
    %v660 = vunpack.c.l.b16 %v206
    %v661 = vunpack.c.h.b16 %v206
    %v662 = vunpack.c.l.b16 %v207
    %v663 = vunpack.c.h.b16 %v207
    %v664 = vunpack.c.l.b16 %v208
    %v665 = vunpack.c.h.b16 %v208
    %v666 = vunpack.c.l.b16 %v209
    %v667 = vunpack.c.h.b16 %v209
    %v668 = vunpack.c.l.b16 %v210
    %v669 = vunpack.c.h.b16 %v210
    %v670 = vunpack.c.l.b16 %v211
    %v671 = vunpack.c.h.b16 %v211
    %v672 = vunpack.c.l.b16 %v212
    %v673 = vunpack.c.h.b16 %v212
    %v674 = vunpack.c.l.b16 %v213
    %v675 = vunpack.c.h.b16 %v213
    %v676 = vunpack.c.l.b16 %v214
    %v677 = vunpack.c.h.b16 %v214
    %v678 = vunpack.c.l.b16 %v215
    %v679 = vunpack.c.h.b16 %v215
    %v680 = vunpack.c.l.b16 %v216
    %v681 = vunpack.c.h.b16 %v216
    %v682 = vunpack.c.l.b16 %v217
    %v683 = vunpack.c.h.b16 %v217
    %v684 = vunpack.c.l.b16 %v218
    %v685 = vunpack.c.h.b16 %v218
    %v686 = vunpack.c.l.b16 %v219
    %v687 = vunpack.c.h.b16 %v219
    %v688 = vunpack.c.l.b16 %v220
    %v689 = vunpack.c.h.b16 %v220
    %v690 = vunpack.c.l.b16 %v221
    %v691 = vunpack.c.h.b16 %v221
    %v692 = vunpack.c.l.b16 %v222
    %v693 = vunpack.c.h.b16 %v222
    %v694 = vunpack.c.l.b16 %v223
    %v695 = vunpack.c.h.b16 %v223
    %v696 = vunpack.c.l.b16 %v224
    %v697 = vunpack.c.h.b16 %v224
    %v698 = vunpack.c.l.b16 %v225
    %v699 = vunpack.c.h.b16 %v225
    %v700 = vunpack.c.l.b16 %v226
    %v701 = vunpack.c.h.b16 %v226
    %v702 = vunpack.c.l.b16 %v227
    %v703 = vunpack.c.h.b16 %v227
    %v704 = vunpack.c.l.b16 %v228
    %v705 = vunpack.c.h.b16 %v228
    %v706 = vunpack.c.l.b16 %v229
    %v707 = vunpack.c.h.b16 %v229
    %v708 = vunpack.c.l.b16 %v230
    %v709 = vunpack.c.h.b16 %v230
    %v710 = vunpack.c.l.b16 %v231
    %v711 = vunpack.c.h.b16 %v231
    %v712 = vunpack.c.l.b16 %v232
    %v713 = vunpack.c.h.b16 %v232
    %v714 = vunpack.c.l.b16 %v233
    %v715 = vunpack.c.h.b16 %v233
    %v716 = vunpack.c.l.b16 %v234
    %v717 = vunpack.c.h.b16 %v234
    %v718 = vunpack.c.l.b16 %v235
    %v719 = vunpack.c.h.b16 %v235
    %v720 = vpack.c.b16 %v434, %v432
    %v721 = vpack.c.b16 %v435, %v433
    %v722 = vpack.c.b16 %v438, %v436
    %v723 = vpack.c.b16 %v439, %v437
    %v724 = vpack.c.b16 %v442, %v440
    %v725 = vpack.c.b16 %v443, %v441
    %v726 = vpack.c.b16 %v446, %v444
    %v727 = vpack.c.b16 %v447, %v445
    %v728 = vpack.c.b16 %v450, %v448
    %v729 = vpack.c.b16 %v451, %v449
    %v730 = vpack.c.b16 %v454, %v452
    %v731 = vpack.c.b16 %v455, %v453
    %v732 = vpack.c.b16 %v458, %v456
    %v733 = vpack.c.b16 %v459, %v457
    %v734 = vpack.c.b16 %v462, %v460
    %v735 = vpack.c.b16 %v463, %v461
    %v736 = vpack.c.b16 %v466, %v464
    %v737 = vpack.c.b16 %v467, %v465
    %v738 = vpack.c.b16 %v470, %v468
    %v739 = vpack.c.b16 %v471, %v469
    %v740 = vpack.c.b16 %v474, %v472
    %v741 = vpack.c.b16 %v475, %v473
    %v742 = vpack.c.b16 %v478, %v476
    %v743 = vpack.c.b16 %v479, %v477
    %v744 = vpack.c.b16 %v482, %v480
    %v745 = vpack.c.b16 %v483, %v481
    %v746 = vpack.c.b16 %v486, %v484
    %v747 = vpack.c.b16 %v487, %v485
    %v748 = vpack.c.b16 %v490, %v488
    %v749 = vpack.c.b16 %v491, %v489
    %v750 = vpack.c.b16 %v494, %v492
    %v751 = vpack.c.b16 %v495, %v493
    %v752 = vpack.c.b16 %v498, %v496
    %v753 = vpack.c.b16 %v499, %v497
    %v754 = vpack.c.b16 %v502, %v500
    %v755 = vpack.c.b16 %v503, %v501
    %v756 = vpack.c.b16 %v506, %v504
    %v757 = vpack.c.b16 %v507, %v505
    %v758 = vpack.c.b16 %v510, %v508
    %v759 = vpack.c.b16 %v511, %v509
    %v760 = vpack.c.b16 %v514, %v512
    %v761 = vpack.c.b16 %v515, %v513
    %v762 = vpack.c.b16 %v518, %v516
    %v763 = vpack.c.b16 %v519, %v517
    %v764 = vpack.c.b16 %v522, %v520
    %v765 = vpack.c.b16 %v523, %v521
    %v766 = vpack.c.b16 %v526, %v524
    %v767 = vpack.c.b16 %v527, %v525
    %v768 = vpack.c.b16 %v530, %v528
    %v769 = vpack.c.b16 %v531, %v529
    %v770 = vpack.c.b16 %v534, %v532
    %v771 = vpack.c.b16 %v535, %v533
    %v772 = vpack.c.b16 %v538, %v536
    %v773 = vpack.c.b16 %v539, %v537
    %v774 = vpack.c.b16 %v542, %v540
    %v775 = vpack.c.b16 %v543, %v541
    %v776 = vpack.c.b16 %v546, %v544
    %v777 = vpack.c.b16 %v547, %v545
    %v778 = vpack.c.b16 %v550, %v548
    %v779 = vpack.c.b16 %v551, %v549
    %v780 = vpack.c.b16 %v554, %v552
    %v781 = vpack.c.b16 %v555, %v553
    %v782 = vpack.c.b16 %v558, %v556
    %v783 = vpack.c.b16 %v559, %v557
    %v784 = vpack.c.b16 %v562, %v560
    %v785 = vpack.c.b16 %v563, %v561
    %v786 = vpack.c.b16 %v566, %v564
    %v787 = vpack.c.b16 %v567, %v565
    %v788 = vpack.c.b16 %v570, %v568
    %v789 = vpack.c.b16 %v571, %v569
    %v790 = vpack.c.b16 %v574, %v572
    %v791 = vpack.c.b16 %v575, %v573
    %v792 = vpack.c.b16 %v578, %v576
    %v793 = vpack.c.b16 %v579, %v577
    %v794 = vpack.c.b16 %v582, %v580
    %v795 = vpack.c.b16 %v583, %v581
    %v796 = vpack.c.b16 %v586, %v584
    %v797 = vpack.c.b16 %v587, %v585
    %v798 = vpack.c.b16 %v590, %v588
    %v799 = vpack.c.b16 %v591, %v589
    %v800 = vpack.c.b16 %v594, %v592
    %v801 = vpack.c.b16 %v595, %v593
    %v802 = vpack.c.b16 %v598, %v596
    %v803 = vpack.c.b16 %v599, %v597
    %v804 = vpack.c.b16 %v602, %v600
    %v805 = vpack.c.b16 %v603, %v601
    %v806 = vpack.c.b16 %v606, %v604
    %v807 = vpack.c.b16 %v607, %v605
    %v808 = vpack.c.b16 %v610, %v608
    %v809 = vpack.c.b16 %v611, %v609
    %v810 = vpack.c.b16 %v614, %v612
    %v811 = vpack.c.b16 %v615, %v613
    %v812 = vpack.c.b16 %v618, %v616
    %v813 = vpack.c.b16 %v619, %v617
    %v814 = vpack.c.b16 %v622, %v620
    %v815 = vpack.c.b16 %v623, %v621
    %v816 = vpack.c.b16 %v626, %v624
    %v817 = vpack.c.b16 %v627, %v625
    %v818 = vpack.c.b16 %v630, %v628
    %v819 = vpack.c.b16 %v631, %v629
    %v820 = vpack.c.b16 %v634, %v632
    %v821 = vpack.c.b16 %v635, %v633
    %v822 = vpack.c.b16 %v638, %v636
    %v823 = vpack.c.b16 %v639, %v637
    %v824 = vpack.c.b16 %v642, %v640
    %v825 = vpack.c.b16 %v643, %v641
    %v826 = vpack.c.b16 %v646, %v644
    %v827 = vpack.c.b16 %v647, %v645
    %v828 = vpack.c.b16 %v650, %v648
    %v829 = vpack.c.b16 %v651, %v649
    %v830 = vpack.c.b16 %v654, %v652
    %v831 = vpack.c.b16 %v655, %v653
    %v832 = vpack.c.b16 %v658, %v656
    %v833 = vpack.c.b16 %v659, %v657
    %v834 = vpack.c.b16 %v662, %v660
    %v835 = vpack.c.b16 %v663, %v661
    %v836 = vpack.c.b16 %v666, %v664
    %v837 = vpack.c.b16 %v667, %v665
    %v838 = vpack.c.b16 %v670, %v668
    %v839 = vpack.c.b16 %v671, %v669
    %v840 = vpack.c.b16 %v674, %v672
    %v841 = vpack.c.b16 %v675, %v673
    %v842 = vpack.c.b16 %v678, %v676
    %v843 = vpack.c.b16 %v679, %v677
    %v844 = vpack.c.b16 %v682, %v680
    %v845 = vpack.c.b16 %v683, %v681
    %v846 = vpack.c.b16 %v686, %v684
    %v847 = vpack.c.b16 %v687, %v685
    %v848 = vpack.c.b16 %v690, %v688
    %v849 = vpack.c.b16 %v691, %v689
    %v850 = vpack.c.b16 %v694, %v692
    %v851 = vpack.c.b16 %v695, %v693
    %v852 = vpack.c.b16 %v698, %v696
    %v853 = vpack.c.b16 %v699, %v697
    %v854 = vpack.c.b16 %v702, %v700
    %v855 = vpack.c.b16 %v703, %v701
    %v856 = vpack.c.b16 %v706, %v704
    %v857 = vpack.c.b16 %v707, %v705
    %v858 = vpack.c.b16 %v710, %v708
    %v859 = vpack.c.b16 %v711, %v709
    %v860 = vpack.c.b16 %v714, %v712
    %v861 = vpack.c.b16 %v715, %v713
    %v862 = vpack.c.b16 %v718, %v716
    %v863 = vpack.c.b16 %v719, %v717
    %1008 = vmatpush.bf16.msra.mxu0 %v734
    %1009 = vmatpush.bf16.msra.mxu0 %v732
    %1010 = vmatpush.bf16.msra.mxu0 %v730
    %1011 = vmatpush.bf16.msra.mxu0 %v728
    %1012 = vmatpush.bf16.msra.mxu0 %v726
    %1013 = vmatpush.bf16.msra.mxu0 %v724
    %1014 = vmatpush.bf16.msra.mxu0 %v722
    %1015 = vmatpush.bf16.msra.mxu0 %v720
    %1016 = vmatmul.bf16.gmra.mxu0 %v270
    %v1017 = vpop.f32.mrf.mxu0
    %v1018 = vadd.f32 %v238, %v1017
    %v1019 = vpop.f32.mrf.mxu0
    %v1020 = vadd.f32 %v238, %v1019
    %1021 = vdwg.mxu0
    %1022 = vmatpush.bf16.msra.mxu0 %v750
    %1023 = vmatpush.bf16.msra.mxu0 %v748
    %1024 = vmatpush.bf16.msra.mxu0 %v746
    %1025 = vmatpush.bf16.msra.mxu0 %v744
    %1026 = vmatpush.bf16.msra.mxu0 %v742
    %1027 = vmatpush.bf16.msra.mxu0 %v740
    %1028 = vmatpush.bf16.msra.mxu0 %v738
    %1029 = vmatpush.bf16.msra.mxu0 %v736
    %1030 = vmatmul.bf16.gmra.mxu0 %v271
    %v1031 = vpop.f32.mrf.mxu0
    %v1032 = vadd.f32 %v1018, %v1031
    %v1033 = vpop.f32.mrf.mxu0
    %v1034 = vadd.f32 %v1020, %v1033
    %1035 = vdwg.mxu0
    %1036 = vmatpush.bf16.msra.mxu0 %v766
    %1037 = vmatpush.bf16.msra.mxu0 %v764
    %1038 = vmatpush.bf16.msra.mxu0 %v762
    %1039 = vmatpush.bf16.msra.mxu0 %v760
    %1040 = vmatpush.bf16.msra.mxu0 %v758
    %1041 = vmatpush.bf16.msra.mxu0 %v756
    %1042 = vmatpush.bf16.msra.mxu0 %v754
    %1043 = vmatpush.bf16.msra.mxu0 %v752
    %1044 = vmatmul.bf16.gmra.mxu0 %v272
    %v1045 = vpop.f32.mrf.mxu0
    %v1046 = vadd.f32 %v1032, %v1045
    %v1047 = vpop.f32.mrf.mxu0
    %v1048 = vadd.f32 %v1034, %v1047
    %1049 = vdwg.mxu0
    %1050 = vmatpush.bf16.msra.mxu0 %v782
    %1051 = vmatpush.bf16.msra.mxu0 %v780
    %1052 = vmatpush.bf16.msra.mxu0 %v778
    %1053 = vmatpush.bf16.msra.mxu0 %v776
    %1054 = vmatpush.bf16.msra.mxu0 %v774
    %1055 = vmatpush.bf16.msra.mxu0 %v772
    %1056 = vmatpush.bf16.msra.mxu0 %v770
    %1057 = vmatpush.bf16.msra.mxu0 %v768
    %1058 = vmatmul.bf16.gmra.mxu0 %v273
    %v1059 = vpop.f32.mrf.mxu0
    %v1060 = vadd.f32 %v1046, %v1059
    %v1061 = vpop.f32.mrf.mxu0
    %v1062 = vadd.f32 %v1048, %v1061
    %1063 = vdwg.mxu0
    %1064 = vmatpush.bf16.msra.mxu0 %v798
    %1065 = vmatpush.bf16.msra.mxu0 %v796
    %1066 = vmatpush.bf16.msra.mxu0 %v794
    %1067 = vmatpush.bf16.msra.mxu0 %v792
    %1068 = vmatpush.bf16.msra.mxu0 %v790
    %1069 = vmatpush.bf16.msra.mxu0 %v788
    %1070 = vmatpush.bf16.msra.mxu0 %v786
    %1071 = vmatpush.bf16.msra.mxu0 %v784
    %1072 = vmatmul.bf16.gmra.mxu0 %v274
    %v1073 = vpop.f32.mrf.mxu0
    %v1074 = vadd.f32 %v1060, %v1073
    %v1075 = vpop.f32.mrf.mxu0
    %v1076 = vadd.f32 %v1062, %v1075
    %1077 = vdwg.mxu0
    %1078 = vmatpush.bf16.msra.mxu0 %v814
    %1079 = vmatpush.bf16.msra.mxu0 %v812
    %1080 = vmatpush.bf16.msra.mxu0 %v810
    %1081 = vmatpush.bf16.msra.mxu0 %v808
    %1082 = vmatpush.bf16.msra.mxu0 %v806
    %1083 = vmatpush.bf16.msra.mxu0 %v804
    %1084 = vmatpush.bf16.msra.mxu0 %v802
    %1085 = vmatpush.bf16.msra.mxu0 %v800
    %1086 = vmatmul.bf16.gmra.mxu0 %v275
    %v1087 = vpop.f32.mrf.mxu0
    %v1088 = vadd.f32 %v1074, %v1087
    %v1089 = vpop.f32.mrf.mxu0
    %v1090 = vadd.f32 %v1076, %v1089
    %1091 = vdwg.mxu0
    %1092 = vmatpush.bf16.msra.mxu0 %v830
    %1093 = vmatpush.bf16.msra.mxu0 %v828
    %1094 = vmatpush.bf16.msra.mxu0 %v826
    %1095 = vmatpush.bf16.msra.mxu0 %v824
    %1096 = vmatpush.bf16.msra.mxu0 %v822
    %1097 = vmatpush.bf16.msra.mxu0 %v820
    %1098 = vmatpush.bf16.msra.mxu0 %v818
    %1099 = vmatpush.bf16.msra.mxu0 %v816
    %1100 = vmatmul.bf16.gmra.mxu0 %v276
    %v1101 = vpop.f32.mrf.mxu0
    %v1102 = vadd.f32 %v1088, %v1101
    %v1103 = vpop.f32.mrf.mxu0
    %v1104 = vadd.f32 %v1090, %v1103
    %1105 = vdwg.mxu0
    %1106 = vmatpush.bf16.msra.mxu0 %v846
    %1107 = vmatpush.bf16.msra.mxu0 %v844
    %1108 = vmatpush.bf16.msra.mxu0 %v842
    %1109 = vmatpush.bf16.msra.mxu0 %v840
    %1110 = vmatpush.bf16.msra.mxu0 %v838
    %1111 = vmatpush.bf16.msra.mxu0 %v836
    %1112 = vmatpush.bf16.msra.mxu0 %v834
    %1113 = vmatpush.bf16.msra.mxu0 %v832
    %1114 = vmatmul.bf16.gmra.mxu0 %v277
    %v1115 = vpop.f32.mrf.mxu0
    %v1116 = vadd.f32 %v1102, %v1115
    %v1117 = vpop.f32.mrf.mxu0
    %v1118 = vadd.f32 %v1104, %v1117
    %1119 = vdwg.mxu0
    %1120 = vmatpush.bf16.msra.mxu0 %v862
    %1121 = vmatpush.bf16.msra.mxu0 %v860
    %1122 = vmatpush.bf16.msra.mxu0 %v858
    %1123 = vmatpush.bf16.msra.mxu0 %v856
    %1124 = vmatpush.bf16.msra.mxu0 %v854
    %1125 = vmatpush.bf16.msra.mxu0 %v852
    %1126 = vmatpush.bf16.msra.mxu0 %v850
    %1127 = vmatpush.bf16.msra.mxu0 %v848
    %1128 = vmatmul.bf16.gmra.mxu0 %v278
    %v1129 = vpop.f32.mrf.mxu0
    %v1130 = vadd.f32 %v1116, %v1129
    %v1131 = vpop.f32.mrf.mxu0
    %v1132 = vadd.f32 %v1118, %v1131
    %1133 = vdwg.mxu0
    %1134 = vmatpush.bf16.msra.mxu0 %v735
    %1135 = vmatpush.bf16.msra.mxu0 %v733
    %1136 = vmatpush.bf16.msra.mxu0 %v731
    %1137 = vmatpush.bf16.msra.mxu0 %v729
    %1138 = vmatpush.bf16.msra.mxu0 %v727
    %1139 = vmatpush.bf16.msra.mxu0 %v725
    %1140 = vmatpush.bf16.msra.mxu0 %v723
    %1141 = vmatpush.bf16.msra.mxu0 %v721
    %1142 = vmatmul.bf16.gmra.mxu0 %v270
    %v1143 = vpop.f32.mrf.mxu0
    %v1144 = vadd.f32 %v239, %v1143
    %v1145 = vpop.f32.mrf.mxu0
    %v1146 = vadd.f32 %v239, %v1145
    %1147 = vdwg.mxu0
    %1148 = vmatpush.bf16.msra.mxu0 %v751
    %1149 = vmatpush.bf16.msra.mxu0 %v749
    %1150 = vmatpush.bf16.msra.mxu0 %v747
    %1151 = vmatpush.bf16.msra.mxu0 %v745
    %1152 = vmatpush.bf16.msra.mxu0 %v743
    %1153 = vmatpush.bf16.msra.mxu0 %v741
    %1154 = vmatpush.bf16.msra.mxu0 %v739
    %1155 = vmatpush.bf16.msra.mxu0 %v737
    %1156 = vmatmul.bf16.gmra.mxu0 %v271
    %v1157 = vpop.f32.mrf.mxu0
    %v1158 = vadd.f32 %v1144, %v1157
    %v1159 = vpop.f32.mrf.mxu0
    %v1160 = vadd.f32 %v1146, %v1159
    %1161 = vdwg.mxu0
    %1162 = vmatpush.bf16.msra.mxu0 %v767
    %1163 = vmatpush.bf16.msra.mxu0 %v765
    %1164 = vmatpush.bf16.msra.mxu0 %v763
    %1165 = vmatpush.bf16.msra.mxu0 %v761
    %1166 = vmatpush.bf16.msra.mxu0 %v759
    %1167 = vmatpush.bf16.msra.mxu0 %v757
    %1168 = vmatpush.bf16.msra.mxu0 %v755
    %1169 = vmatpush.bf16.msra.mxu0 %v753
    %1170 = vmatmul.bf16.gmra.mxu0 %v272
    %v1171 = vpop.f32.mrf.mxu0
    %v1172 = vadd.f32 %v1158, %v1171
    %v1173 = vpop.f32.mrf.mxu0
    %v1174 = vadd.f32 %v1160, %v1173
    %1175 = vdwg.mxu0
    %1176 = vmatpush.bf16.msra.mxu0 %v783
    %1177 = vmatpush.bf16.msra.mxu0 %v781
    %1178 = vmatpush.bf16.msra.mxu0 %v779
    %1179 = vmatpush.bf16.msra.mxu0 %v777
    %1180 = vmatpush.bf16.msra.mxu0 %v775
    %1181 = vmatpush.bf16.msra.mxu0 %v773
    %1182 = vmatpush.bf16.msra.mxu0 %v771
    %1183 = vmatpush.bf16.msra.mxu0 %v769
    %1184 = vmatmul.bf16.gmra.mxu0 %v273
    %v1185 = vpop.f32.mrf.mxu0
    %v1186 = vadd.f32 %v1172, %v1185
    %v1187 = vpop.f32.mrf.mxu0
    %v1188 = vadd.f32 %v1174, %v1187
    %1189 = vdwg.mxu0
    %1190 = vmatpush.bf16.msra.mxu0 %v799
    %1191 = vmatpush.bf16.msra.mxu0 %v797
    %1192 = vmatpush.bf16.msra.mxu0 %v795
    %1193 = vmatpush.bf16.msra.mxu0 %v793
    %1194 = vmatpush.bf16.msra.mxu0 %v791
    %1195 = vmatpush.bf16.msra.mxu0 %v789
    %1196 = vmatpush.bf16.msra.mxu0 %v787
    %1197 = vmatpush.bf16.msra.mxu0 %v785
    %1198 = vmatmul.bf16.gmra.mxu0 %v274
    %v1199 = vpop.f32.mrf.mxu0
    %v1200 = vadd.f32 %v1186, %v1199
    %v1201 = vpop.f32.mrf.mxu0
    %v1202 = vadd.f32 %v1188, %v1201
    %1203 = vdwg.mxu0
    %1204 = vmatpush.bf16.msra.mxu0 %v815
    %1205 = vmatpush.bf16.msra.mxu0 %v813
    %1206 = vmatpush.bf16.msra.mxu0 %v811
    %1207 = vmatpush.bf16.msra.mxu0 %v809
    %1208 = vmatpush.bf16.msra.mxu0 %v807
    %1209 = vmatpush.bf16.msra.mxu0 %v805
    %1210 = vmatpush.bf16.msra.mxu0 %v803
    %1211 = vmatpush.bf16.msra.mxu0 %v801
    %1212 = vmatmul.bf16.gmra.mxu0 %v275
    %v1213 = vpop.f32.mrf.mxu0
    %v1214 = vadd.f32 %v1200, %v1213
    %v1215 = vpop.f32.mrf.mxu0
    %v1216 = vadd.f32 %v1202, %v1215
    %1217 = vdwg.mxu0
    %1218 = vmatpush.bf16.msra.mxu0 %v831
    %1219 = vmatpush.bf16.msra.mxu0 %v829
    %1220 = vmatpush.bf16.msra.mxu0 %v827
    %1221 = vmatpush.bf16.msra.mxu0 %v825
    %1222 = vmatpush.bf16.msra.mxu0 %v823
    %1223 = vmatpush.bf16.msra.mxu0 %v821
    %1224 = vmatpush.bf16.msra.mxu0 %v819
    %1225 = vmatpush.bf16.msra.mxu0 %v817
    %1226 = vmatmul.bf16.gmra.mxu0 %v276
    %v1227 = vpop.f32.mrf.mxu0
    %v1228 = vadd.f32 %v1214, %v1227
    %v1229 = vpop.f32.mrf.mxu0
    %v1230 = vadd.f32 %v1216, %v1229
    %1231 = vdwg.mxu0
    %1232 = vmatpush.bf16.msra.mxu0 %v847
    %1233 = vmatpush.bf16.msra.mxu0 %v845
    %1234 = vmatpush.bf16.msra.mxu0 %v843
    %1235 = vmatpush.bf16.msra.mxu0 %v841
    %1236 = vmatpush.bf16.msra.mxu0 %v839
    %1237 = vmatpush.bf16.msra.mxu0 %v837
    %1238 = vmatpush.bf16.msra.mxu0 %v835
    %1239 = vmatpush.bf16.msra.mxu0 %v833
    %1240 = vmatmul.bf16.gmra.mxu0 %v277
    %v1241 = vpop.f32.mrf.mxu0
    %v1242 = vadd.f32 %v1228, %v1241
    %v1243 = vpop.f32.mrf.mxu0
    %v1244 = vadd.f32 %v1230, %v1243
    %1245 = vdwg.mxu0
    %1246 = vmatpush.bf16.msra.mxu0 %v863
    %1247 = vmatpush.bf16.msra.mxu0 %v861
    %1248 = vmatpush.bf16.msra.mxu0 %v859
    %1249 = vmatpush.bf16.msra.mxu0 %v857
    %1250 = vmatpush.bf16.msra.mxu0 %v855
    %1251 = vmatpush.bf16.msra.mxu0 %v853
    %1252 = vmatpush.bf16.msra.mxu0 %v851
    %1253 = vmatpush.bf16.msra.mxu0 %v849
    %1254 = vmatmul.bf16.gmra.mxu0 %v278
    %v1255 = vpop.f32.mrf.mxu0
    %v1256 = vadd.f32 %v1242, %v1255
    %v1257 = vpop.f32.mrf.mxu0
    %v1258 = vadd.f32 %v1244, %v1257
    %1259 = vdwg.mxu0
    %v1260 = vmax.f32 %v1130, 0.0
    %v1261 = vmax.f32 %v1256, 0.0
    %v1262 = vmax.f32 %v1132, 0.0
    %v1263 = vmax.f32 %v1258, 0.0
    %v1264 = vpack.c.bf16 %v1262, %v1260
    %v1265 = vpack.c.bf16 %v1263, %v1261
    %v1266 = vld [vmem:[#allocation8] sm:$0xf]
    %v1267 = vld [vmem:[#allocation8 + $0x4] sm:$0xf]
    %v1268 = vld [vmem:[#allocation8 + $0x8] sm:$0xf]
    %v1269 = vld [vmem:[#allocation8 + $0xc] sm:$0xf]
    %v1270 = vld [vmem:[#allocation8 + $0x10] sm:$0xf]
    %v1271 = vld [vmem:[#allocation8 + $0x14] sm:$0xf]
    %v1272 = vld [vmem:[#allocation8 + $0x18] sm:$0xf]
    %v1273 = vld [vmem:[#allocation8 + $0x1c] sm:$0xf]
    %v1274 = vld [vmem:[#allocation8 + $0x20] sm:$0xf]
    %v1275 = vld [vmem:[#allocation8 + $0x24] sm:$0xf]
    %v1276 = vld [vmem:[#allocation8 + $0x28] sm:$0xf]
    %v1277 = vld [vmem:[#allocation8 + $0x2c] sm:$0xf]
    %v1278 = vld [vmem:[#allocation8 + $0x30] sm:$0xf]
    %v1279 = vld [vmem:[#allocation8 + $0x34] sm:$0xf]
    %v1280 = vld [vmem:[#allocation8 + $0x38] sm:$0xf]
    %v1281 = vld [vmem:[#allocation8 + $0x3c] sm:$0xf]
    %v1282 = vld [vmem:[#allocation8 + $0x40] sm:$0xf]
    %v1283 = vld [vmem:[#allocation8 + $0x44] sm:$0xf]
    %v1284 = vld [vmem:[#allocation8 + $0x48] sm:$0xf]
    %v1285 = vld [vmem:[#allocation8 + $0x4c] sm:$0xf]
    %v1286 = vld [vmem:[#allocation8 + $0x50] sm:$0xf]
    %v1287 = vld [vmem:[#allocation8 + $0x54] sm:$0xf]
    %v1288 = vld [vmem:[#allocation8 + $0x58] sm:$0xf]
    %v1289 = vld [vmem:[#allocation8 + $0x5c] sm:$0xf]
    %v1290 = vld [vmem:[#allocation8 + $0x60] sm:$0xf]
    %v1291 = vld [vmem:[#allocation8 + $0x64] sm:$0xf]
    %v1292 = vld [vmem:[#allocation8 + $0x68] sm:$0xf]
    %v1293 = vld [vmem:[#allocation8 + $0x6c] sm:$0xf]
    %v1294 = vld [vmem:[#allocation8 + $0x70] sm:$0xf]
    %v1295 = vld [vmem:[#allocation8 + $0x74] sm:$0xf]
    %v1296 = vld [vmem:[#allocation8 + $0x78] sm:$0xf]
    %v1297 = vld [vmem:[#allocation8 + $0x7c] sm:$0xf]
    %v1298 = vld [vmem:[%s4] sm:$0x1]
    %v1300 = vperm.slane %v1298, 0
    %v1334 = vunpack.c.l.b16 %v1266
    %v1335 = vunpack.c.l.b16 %v1267
    %v1336 = vunpack.c.l.b16 %v1268
    %v1337 = vunpack.c.l.b16 %v1269
    %v1338 = vunpack.c.l.b16 %v1270
    %v1339 = vunpack.c.l.b16 %v1271
    %v1340 = vunpack.c.l.b16 %v1272
    %v1341 = vunpack.c.l.b16 %v1273
    %v1342 = vunpack.c.l.b16 %v1274
    %v1343 = vunpack.c.l.b16 %v1275
    %v1344 = vunpack.c.l.b16 %v1276
    %v1345 = vunpack.c.l.b16 %v1277
    %v1346 = vunpack.c.l.b16 %v1278
    %v1347 = vunpack.c.l.b16 %v1279
    %v1348 = vunpack.c.l.b16 %v1280
    %v1349 = vunpack.c.l.b16 %v1281
    %v1350 = vunpack.c.l.b16 %v1282
    %v1351 = vunpack.c.l.b16 %v1283
    %v1352 = vunpack.c.l.b16 %v1284
    %v1353 = vunpack.c.l.b16 %v1285
    %v1354 = vunpack.c.l.b16 %v1286
    %v1355 = vunpack.c.l.b16 %v1287
    %v1356 = vunpack.c.l.b16 %v1288
    %v1357 = vunpack.c.l.b16 %v1289
    %v1358 = vunpack.c.l.b16 %v1290
    %v1359 = vunpack.c.l.b16 %v1291
    %v1360 = vunpack.c.l.b16 %v1292
    %v1361 = vunpack.c.l.b16 %v1293
    %v1362 = vunpack.c.l.b16 %v1294
    %v1363 = vunpack.c.l.b16 %v1295
    %v1364 = vunpack.c.l.b16 %v1296
    %v1365 = vunpack.c.l.b16 %v1297
    %v1366 = vpack.c.b16 %v1335, %v1334
    %v1367 = vpack.c.b16 %v1337, %v1336
    %v1368 = vpack.c.b16 %v1339, %v1338
    %v1369 = vpack.c.b16 %v1341, %v1340
    %v1370 = vpack.c.b16 %v1343, %v1342
    %v1371 = vpack.c.b16 %v1345, %v1344
    %v1372 = vpack.c.b16 %v1347, %v1346
    %v1373 = vpack.c.b16 %v1349, %v1348
    %v1374 = vpack.c.b16 %v1351, %v1350
    %v1375 = vpack.c.b16 %v1353, %v1352
    %v1376 = vpack.c.b16 %v1355, %v1354
    %v1377 = vpack.c.b16 %v1357, %v1356
    %v1378 = vpack.c.b16 %v1359, %v1358
    %v1379 = vpack.c.b16 %v1361, %v1360
    %v1380 = vpack.c.b16 %v1363, %v1362
    %v1381 = vpack.c.b16 %v1365, %v1364
    %1398 = vmatpush.bf16.msra.mxu0 %v1373
    %1399 = vmatpush.bf16.msra.mxu0 %v1372
    %1400 = vmatpush.bf16.msra.mxu0 %v1371
    %1401 = vmatpush.bf16.msra.mxu0 %v1370
    %1402 = vmatpush.bf16.msra.mxu0 %v1369
    %1403 = vmatpush.bf16.msra.mxu0 %v1368
    %1404 = vmatpush.bf16.msra.mxu0 %v1367
    %1405 = vmatpush.bf16.msra.mxu0 %v1366
    %1406 = vmatmul.bf16.gmra.mxu0 %v1264
    %v1407 = vpop.f32.mrf.mxu0
    %v1408 = vadd.f32 %v1300, %v1407
    %v1409 = vpop.f32.mrf.mxu0
    %v1410 = vadd.f32 %v1300, %v1409
    %1411 = vdwg.mxu0
    %1412 = vmatpush.bf16.msra.mxu0 %v1381
    %1413 = vmatpush.bf16.msra.mxu0 %v1380
    %1414 = vmatpush.bf16.msra.mxu0 %v1379
    %1415 = vmatpush.bf16.msra.mxu0 %v1378
    %1416 = vmatpush.bf16.msra.mxu0 %v1377
    %1417 = vmatpush.bf16.msra.mxu0 %v1376
    %1418 = vmatpush.bf16.msra.mxu0 %v1375
    %1419 = vmatpush.bf16.msra.mxu0 %v1374
    %1420 = vmatmul.bf16.gmra.mxu0 %v1265
    %v1421 = vpop.f32.mrf.mxu0
    %v1422 = vadd.f32 %v1408, %v1421
    %v1423 = vpop.f32.mrf.mxu0
    %v1424 = vadd.f32 %v1410, %v1423
    %1425 = vdwg.mxu0
    %1426 = vst [vmem:[#allocation10] sm:$0xff] %v1422
    %1427 = vst [vmem:[#allocation10 + $0x8] sm:$0xff] %v1424
    // Predicated region
    $region38: #{tpu_custom_call.1} parent=1 // pred_check
      _
    $region39: #{tpu_custom_call.1} parent=1 // pred_check_branch
      %1429 = sbr.rel (0) target = $region41
    $region40: #{tpu_custom_call.1} parent=1 // pred_region
      %1431 = vsyncadd [#allocation4], 0
      %s1432 = sshll.u32 [#allocation10], 4
      %s1433 = int_to_ptr.vmem [resolvable:$true] %s1432
      %s1434 = sshll.u32 %s5, 4
      %s1435 = int_to_ptr.hbm [resolvable:$true] %s1434
      %1440 = dma.vmem_to_hbm [thread:$0]  %s1433, 256, %s1435, [#allocation4], 128, 128, 8
    $region41: #{tpu_custom_call.1} parent=1 // pred_fallthru
      _
    // Predicated region
    $region42: #{tpu_custom_call.1} parent=1 // pred_check
      _
    $region43: #{tpu_custom_call.1} parent=1 // pred_check_branch
      %1442 = sbr.rel (0) target = $region45
    $region44: #{tpu_custom_call.1} parent=1 // pred_region
      %1444 = dma.done [#allocation4], 256
    $region45: #{tpu_custom_call.1} parent=1 // pred_fallthru
      _
    %1445 = vsyncpa [#allocation3], 1
    %1446 = vsyncpa [#allocation6], 1
    %1447 = vsyncpa [#allocation9], 1
    %1448 = vsyncpa [#allocation4], 1

</llo_original>
